<compile_context>
chip_gen: v6e
topology: v6e:2x2x1
jax: 0.10.0
libtpu: 0.0.40
codegen_flags: <defaults>
</compile_context>

<pallas_src>
from functools import partial

import jax
import jax.numpy as jnp
from jax.experimental import pallas as pl
from jax.experimental.pallas import tpu as pltpu

BN_EPS = 1e-5


# --------------------------------------------------------------------------- #
# Kernel
# --------------------------------------------------------------------------- #
def _mlp_kernel(xb_ref, xe_ref,
                w1a_ref, w1b_ref, b1_ref,
                w2_ref, b2_ref,
                w3_ref, b3_ref,
                o_ref):
    xb = xb_ref[...]
    xe = xe_ref[...]

    # fc1 (+ folded bn1) + relu; cat(base, expert) @ W1 == base@W1a + expert@W1b.
    h = (jnp.dot(xb, w1a_ref[...], preferred_element_type=jnp.float32)
         + jnp.dot(xe, w1b_ref[...], preferred_element_type=jnp.float32)
         + b1_ref[...])
    h = jnp.maximum(h, 0.0)
    # TODO(synk): Dropout(0.1) implemented as eval-mode identity (no RNG mask).

    # fc2 (+ folded bn2) + relu; activation narrowed to compute dtype, f32 accum.
    w2 = w2_ref[...]
    h = jnp.dot(h.astype(w2.dtype), w2, preferred_element_type=jnp.float32) + b2_ref[...]
    h = jnp.maximum(h, 0.0)
    # TODO(synk): Dropout(0.2) implemented as eval-mode identity (no RNG mask).

    # fc3
    w3 = w3_ref[...]
    h = jnp.dot(h.astype(w3.dtype), w3, preferred_element_type=jnp.float32) + b3_ref[...]
    o_ref[...] = h.astype(o_ref.dtype)


# --------------------------------------------------------------------------- #
# Wrapper
# --------------------------------------------------------------------------- #
def _pick_tile_rows(n_packed):
    """Largest multiple-of-8 row tile (<= 8192 packed rows, i.e. a few MiB per
    double-buffered tile at 128 lanes) that still yields >= 2 grid steps when
    possible (DMA pipelining + v7x megacore sharding).  Tiny inputs get one
    full-extent block."""
    if n_packed <= 8:
        return max(int(n_packed), 1)
    for tm in (8192, 4096, 2048, 1024, 512, 256, 128, 64, 32, 16, 8):
        if pl.cdiv(n_packed, tm) >= 2:
            return tm
    return 8


def color_mlp_pallas(base_flat, expert_flat, folded_params, *,
                     tile_rows=None, compute_dtype=jnp.bfloat16):
    """base_flat/expert_flat: (N, num_bins) f32 -> (N, num_bins) f32.

    Eval-mode only (dropout identity, BN folded with running stats).
    compute_dtype=bfloat16 halves HBM read traffic and uses the native bf16
    MXU path; pass jnp.float32 for a bit-close match to the f32 reference.
    """
    w1a, w1b, b1, w2, b2, w3, b3 = folded_params
    n, num_bins = base_flat.shape

    # Lane-dense packing factor: pack `pack` logical rows into one 128-lane row.
    pack = 128 // num_bins if (num_bins < 128 and 128 % num_bins == 0) else 1
    P = pack * num_bins

    rem = n % pack
    if rem:
        # Only when N is not a multiple of `pack`: pads <= pack-1 rows (tiny).
        pr = pack - rem
        base_flat = jnp.pad(base_flat, ((0, pr), (0, 0)))
        expert_flat = jnp.pad(expert_flat, ((0, pr), (0, 0)))
    n_rows = base_flat.shape[0]
    n_packed = n_rows // pack

    # Free reshapes (contiguous row-major): (n_rows, B) -> (n_packed, pack*B).
    xb = base_flat.reshape(n_packed, P).astype(compute_dtype)
    xe = expert_flat.reshape(n_packed, P).astype(compute_dtype)

    # Block-diagonal replication of the (B,B) weights -> (P,P); biases -> (1,P).
    def bd(w):
        return w if pack == 1 else jnp.kron(jnp.eye(pack, dtype=w.dtype), w)

    def tile_b(b):
        return b if pack == 1 else jnp.tile(b, (1, pack))

    w1a_p = bd(w1a).astype(compute_dtype)
    w1b_p = bd(w1b).astype(compute_dtype)
    w2_p = bd(w2).astype(compute_dtype)
    w3_p = bd(w3).astype(compute_dtype)
    b1_p = tile_b(b1).astype(jnp.float32)
    b2_p = tile_b(b2).astype(jnp.float32)
    b3_p = tile_b(b3).astype(jnp.float32)

    tm = _pick_tile_rows(n_packed) if tile_rows is None else tile_rows
    grid = (pl.cdiv(n_packed, tm),)   # ragged last block masked by Pallas

    params = (w1a_p, w1b_p, b1_p, w2_p, b2_p, w3_p, b3_p)
    rows = lambda i: (i, 0)      # x / out: tiled over packed rows
    full = lambda i: (0, 0)      # params: single full block, resident in VMEM
    param_specs = [pl.BlockSpec(p.shape, full) for p in params]

    in_bytes = jnp.dtype(compute_dtype).itemsize
    cost = pl.CostEstimate(
        flops=4 * 2 * n_packed * P * P,                  # 4 MXU matmuls (incl. blockdiag zeros)
        transcendentals=0,
        bytes_accessed=(2 * n_packed * P * in_bytes      # base + expert reads
                        + n_packed * P * 4               # f32 output write
                        + sum(int(p.size) * p.dtype.itemsize for p in params)),
    )

    out = pl.pallas_call(
        _mlp_kernel,
        out_shape=jax.ShapeDtypeStruct((n_packed, P), jnp.float32),
        grid_spec=pltpu.PrefetchScalarGridSpec(
            num_scalar_prefetch=0,
            grid=grid,
            in_specs=[pl.BlockSpec((tm, P), rows),
                      pl.BlockSpec((tm, P), rows)] + param_specs,
            out_specs=pl.BlockSpec((tm, P), rows),
        ),
        compiler_params=pltpu.CompilerParams(
            dimension_semantics=("parallel",),
            vmem_limit_bytes=48 * 1024 * 1024,  # <= v7x 64 MiB phys; ample on v5e/v6e
        ),
        cost_estimate=cost,
    )(xb, xe, *params)

    out = out.reshape(n_rows, num_bins)   # free reshape back to logical rows
    if rem:
        out = out[:n]
    return out


def _fold_bn_into_linear(w, b, gamma, beta, mean, var):
    """Fold eval-mode BatchNorm1d into the preceding Linear.

    w: (in, out), b/gamma/beta/mean/var: (1, out).
    """
    s = gamma * jax.lax.rsqrt(var + BN_EPS)
    return w * s, (b - mean) * s + beta


@partial(jax.jit, static_argnames=("compute_dtype",))
def color_model_mlp_forward(preds_semantics_base, preds_color_base,
                            preds_color_expert, params,
                            compute_dtype=jnp.bfloat16):
    """Eval-mode forward of ColorModelMLP (dropout identity, BN running stats)."""
    (w1, b1, g1, be1, m1, v1,
     w2, b2, g2, be2, m2, v2,
     w3, b3) = params

    # One-time tiny folds / splits on parameter tensors (wrapper-side).
    w1f, b1f = _fold_bn_into_linear(w1, b1, g1, be1, m1, v1)
    w2f, b2f = _fold_bn_into_linear(w2, b2, g2, be2, m2, v2)

    samples, channels, num_bins = preds_color_base.shape
    n = samples * channels
    base_flat = preds_color_base.reshape(n, num_bins).astype(jnp.float32)
    expert_flat = preds_color_expert.reshape(n, num_bins).astype(jnp.float32)

    # cat(base, expert, -1) @ W1 == base @ W1[:B] + expert @ W1[B:]
    w1a, w1b = w1f[:num_bins], w1f[num_bins:]

    out_flat = color_mlp_pallas(
        base_flat, expert_flat, (w1a, w1b, b1f, w2f, b2f, w3, b3),
        compute_dtype=compute_dtype)
    out = out_flat.reshape(samples, channels, num_bins)
    return preds_semantics_base, out


# --------------------------------------------------------------------------- #
# Params + reference
# --------------------------------------------------------------------------- #
def make_params(key, num_bins):
    """Deterministic parameters matching the nn.Module shapes.

    Linear weights are stored transposed as (in_features, out_features).
    BatchNorm params/stats are (1, num_bins) for broadcast.
    """
    ks = jax.random.split(key, 8)
    two_b = num_bins * 2

    def lin(k, fan_in, fan_out):
        bound = 1.0 / jnp.sqrt(fan_in)
        kw, kb = jax.random.split(k)
        w = jax.random.uniform(kw, (fan_in, fan_out), jnp.float32, -bound, bound)
        b = jax.random.uniform(kb, (1, fan_out), jnp.float32, -bound, bound)
        return w, b

    w1, b1 = lin(ks[0], two_b, num_bins)
    w2, b2 = lin(ks[1], num_bins, num_bins)
    w3, b3 = lin(ks[2], num_bins, num_bins)

    # Perturb BN params/stats so the folded BN math is actually exercised.
    g1 = 1.0 + 0.1 * jax.random.normal(ks[3], (1, num_bins), jnp.float32)
    be1 = 0.1 * jax.random.normal(ks[4], (1, num_bins), jnp.float32)
    m1 = 0.05 * jax.random.normal(ks[5], (1, num_bins), jnp.float32)
    v1 = 1.0 + 0.1 * jax.random.uniform(ks[6], (1, num_bins), jnp.float32)

    g2 = 1.0 + 0.05 * jax.random.normal(ks[7], (1, num_bins), jnp.float32)
    be2 = jnp.zeros((1, num_bins), jnp.float32)
    m2 = jnp.zeros((1, num_bins), jnp.float32)
    v2 = jnp.ones((1, num_bins), jnp.float32)

    return (w1, b1, g1, be1, m1, v1,
            w2, b2, g2, be2, m2, v2,
            w3, b3)


def _reference_forward(preds_color_base, preds_color_expert, params):
    """Pure-JAX eval-mode reference (mirrors the PyTorch module)."""
    (w1, b1, g1, be1, m1, v1,
     w2, b2, g2, be2, m2, v2,
     w3, b3) = params
    x = jnp.concatenate([preds_color_base, preds_color_expert], axis=-1)
    s, c, tb = x.shape
    x = x.reshape(s * c, tb).astype(jnp.float32)
    h = x @ w1 + b1
    h = (h - m1) * jax.lax.rsqrt(v1 + BN_EPS) * g1 + be1
    h = jnp.maximum(h, 0.0)
    h = h @ w2 + b2
    h = (h - m2) * jax.lax.rsqrt(v2 + BN_EPS) * g2 + be2
    h = jnp.maximum(h, 0.0)
    h = h @ w3 + b3
    return h.reshape(s, c, tb // 2)


if __name__ == "__main__":
    samples, channels, num_bins = 2, 4, 32

    key = jax.random.PRNGKey(0)
    k_sem, k_base, k_exp, k_par = jax.random.split(key, 4)

    preds_semantics_base = jax.random.normal(k_sem, (samples, 5, 8, 8), jnp.float32)
    preds_color_base = jax.random.normal(k_base, (samples, channels, num_bins), jnp.float32)
    preds_color_expert = jax.random.normal(k_exp, (samples, channels, num_bins), jnp.float32)

    params = make_params(k_par, num_bins)
    ref = _reference_forward(preds_color_base, preds_color_expert, params)

    # f32 path: bit-close validation against the reference.
    sem_out, color_f32 = color_model_mlp_forward(
        preds_semantics_base, preds_color_base, preds_color_expert, params,
        compute_dtype=jnp.float32)
    jax.block_until_ready((sem_out, color_f32))
    assert sem_out.shape == preds_semantics_base.shape
    assert color_f32.shape == (samples, channels, num_bins)
    assert jnp.allclose(color_f32, ref, rtol=1e-4, atol=1e-4), (
        float(jnp.max(jnp.abs(color_f32 - ref))))

    # bf16 default (perf config): looser tolerance vs. the f32 reference.
    _, color_bf16 = color_model_mlp_forward(
        preds_semantics_base, preds_color_base, preds_color_expert, params)
    jax.block_until_ready(color_bf16)
    assert jnp.allclose(color_bf16, ref, rtol=5e-2, atol=1e-1), (
        float(jnp.max(jnp.abs(color_bf16 - ref))))

    # Ragged case: N = samples*channels not a multiple of the lane-pack factor,
    # exercising the partial last grid block and the <=3-row pack pad.
    s2, c2 = 37, 3
    b2_in = jax.random.normal(jax.random.PRNGKey(1), (s2, c2, num_bins), jnp.float32)
    e2_in = jax.random.normal(jax.random.PRNGKey(2), (s2, c2, num_bins), jnp.float32)
    _, color2 = color_model_mlp_forward(
        preds_semantics_base, b2_in, e2_in, params, compute_dtype=jnp.float32)
    jax.block_until_ready(color2)
    ref2 = _reference_forward(b2_in, e2_in, params)
    assert color2.shape == (s2, c2, num_bins)
    assert jnp.allclose(color2, ref2, rtol=1e-4, atol=1e-4), (
        float(jnp.max(jnp.abs(color2 - ref2))))

    print("KERNEL_OK")
</pallas_src>

<mosaic_0001>
module attributes {stable_mosaic.version = 11 : i64} {
  func.func @_mlp_kernel(%arg0: i32, %arg1: memref<2x128xf32, #tpu.memory_space<vmem>>, %arg2: memref<2x128xf32, #tpu.memory_space<vmem>>, %arg3: memref<128x128xf32, #tpu.memory_space<vmem>>, %arg4: memref<128x128xf32, #tpu.memory_space<vmem>>, %arg5: memref<1x128xf32, #tpu.memory_space<vmem>>, %arg6: memref<128x128xf32, #tpu.memory_space<vmem>>, %arg7: memref<1x128xf32, #tpu.memory_space<vmem>>, %arg8: memref<128x128xf32, #tpu.memory_space<vmem>>, %arg9: memref<1x128xf32, #tpu.memory_space<vmem>>, %arg10: memref<2x128xf32, #tpu.memory_space<vmem>>) attributes {dimension_semantics = [#tpu.dimension_semantics<parallel>], iteration_bounds = array<i64: 1>, scalar_prefetch = 0 : i64, scratch_operands = 0 : i64, tpu.core_type = #tpu.core_type<tc>, window_params = [{transform_indices = @transform_0, window_bounds = array<i64: 2, 128>}, {transform_indices = @transform_1, window_bounds = array<i64: 2, 128>}, {pipeline_mode = #tpu.pipeline_mode<synchronous>, transform_indices = @transform_2, window_bounds = array<i64: 128, 128>}, {pipeline_mode = #tpu.pipeline_mode<synchronous>, transform_indices = @transform_3, window_bounds = array<i64: 128, 128>}, {pipeline_mode = #tpu.pipeline_mode<synchronous>, transform_indices = @transform_4, window_bounds = array<i64: 1, 128>}, {pipeline_mode = #tpu.pipeline_mode<synchronous>, transform_indices = @transform_5, window_bounds = array<i64: 128, 128>}, {pipeline_mode = #tpu.pipeline_mode<synchronous>, transform_indices = @transform_6, window_bounds = array<i64: 1, 128>}, {pipeline_mode = #tpu.pipeline_mode<synchronous>, transform_indices = @transform_7, window_bounds = array<i64: 128, 128>}, {pipeline_mode = #tpu.pipeline_mode<synchronous>, transform_indices = @transform_8, window_bounds = array<i64: 1, 128>}, {transform_indices = @transform_9, window_bounds = array<i64: 2, 128>}]} {
    %c0 = arith.constant 0 : index
    %c0_0 = arith.constant 0 : index
    %0 = vector.load %arg1[%c0, %c0_0] : memref<2x128xf32, #tpu.memory_space<vmem>>, vector<2x128xf32>
    %c0_1 = arith.constant 0 : index
    %c0_2 = arith.constant 0 : index
    %1 = vector.load %arg2[%c0_1, %c0_2] : memref<2x128xf32, #tpu.memory_space<vmem>>, vector<2x128xf32>
    %c0_3 = arith.constant 0 : index
    %c0_4 = arith.constant 0 : index
    %2 = vector.load %arg3[%c0_3, %c0_4] : memref<128x128xf32, #tpu.memory_space<vmem>>, vector<128x128xf32>
    %cst = arith.constant dense<0.000000e+00> : vector<2x128xf32>
    %3 = tpu.matmul %0, %2, %cst {dimension_numbers = #tpu.dot_dimension_numbers<[1], [0], [0], [1], [0, 0, 1, 1], [], []>} : vector<2x128xf32>, vector<128x128xf32>, vector<2x128xf32> -> vector<2x128xf32>
    %c0_5 = arith.constant 0 : index
    %c0_6 = arith.constant 0 : index
    %4 = vector.load %arg4[%c0_5, %c0_6] : memref<128x128xf32, #tpu.memory_space<vmem>>, vector<128x128xf32>
    %cst_7 = arith.constant dense<0.000000e+00> : vector<2x128xf32>
    %5 = tpu.matmul %1, %4, %cst_7 {dimension_numbers = #tpu.dot_dimension_numbers<[1], [0], [0], [1], [0, 0, 1, 1], [], []>} : vector<2x128xf32>, vector<128x128xf32>, vector<2x128xf32> -> vector<2x128xf32>
    %6 = arith.addf %3, %5 : vector<2x128xf32>
    %c0_8 = arith.constant 0 : index
    %c0_9 = arith.constant 0 : index
    %7 = vector.load %arg5[%c0_8, %c0_9] : memref<1x128xf32, #tpu.memory_space<vmem>>, vector<1x128xf32>
    %8 = vector.broadcast %7 : vector<1x128xf32> to vector<2x128xf32>
    %9 = arith.addf %6, %8 : vector<2x128xf32>
    %cst_10 = arith.constant 0.000000e+00 : f32
    %10 = vector.broadcast %cst_10 : f32 to vector<2x128xf32>
    %11 = arith.maximumf %9, %10 : vector<2x128xf32>
    %c0_11 = arith.constant 0 : index
    %c0_12 = arith.constant 0 : index
    %12 = vector.load %arg6[%c0_11, %c0_12] : memref<128x128xf32, #tpu.memory_space<vmem>>, vector<128x128xf32>
    %cst_13 = arith.constant dense<0.000000e+00> : vector<2x128xf32>
    %13 = tpu.matmul %11, %12, %cst_13 {dimension_numbers = #tpu.dot_dimension_numbers<[1], [0], [0], [1], [0, 0, 1, 1], [], []>} : vector<2x128xf32>, vector<128x128xf32>, vector<2x128xf32> -> vector<2x128xf32>
    %c0_14 = arith.constant 0 : index
    %c0_15 = arith.constant 0 : index
    %14 = vector.load %arg7[%c0_14, %c0_15] : memref<1x128xf32, #tpu.memory_space<vmem>>, vector<1x128xf32>
    %15 = vector.broadcast %14 : vector<1x128xf32> to vector<2x128xf32>
    %16 = arith.addf %13, %15 : vector<2x128xf32>
    %cst_16 = arith.constant 0.000000e+00 : f32
    %17 = vector.broadcast %cst_16 : f32 to vector<2x128xf32>
    %18 = arith.maximumf %16, %17 : vector<2x128xf32>
    %c0_17 = arith.constant 0 : index
    %c0_18 = arith.constant 0 : index
    %19 = vector.load %arg8[%c0_17, %c0_18] : memref<128x128xf32, #tpu.memory_space<vmem>>, vector<128x128xf32>
    %cst_19 = arith.constant dense<0.000000e+00> : vector<2x128xf32>
    %20 = tpu.matmul %18, %19, %cst_19 {dimension_numbers = #tpu.dot_dimension_numbers<[1], [0], [0], [1], [0, 0, 1, 1], [], []>} : vector<2x128xf32>, vector<128x128xf32>, vector<2x128xf32> -> vector<2x128xf32>
    %c0_20 = arith.constant 0 : index
    %c0_21 = arith.constant 0 : index
    %21 = vector.load %arg9[%c0_20, %c0_21] : memref<1x128xf32, #tpu.memory_space<vmem>>, vector<1x128xf32>
    %22 = vector.broadcast %21 : vector<1x128xf32> to vector<2x128xf32>
    %23 = arith.addf %20, %22 : vector<2x128xf32>
    %c0_22 = arith.constant 0 : index
    %c0_23 = arith.constant 0 : index
    %24 = vector.load %arg10[%c0_22, %c0_23] : memref<2x128xf32, #tpu.memory_space<vmem>>, vector<2x128xf32>
    tpu.vector_store %arg10[%c0_22, %c0_23], %23 {strides = array<i32>} : memref<2x128xf32, #tpu.memory_space<vmem>>, vector<2x128xf32>,
    return
  }
  func.func @transform_0(%arg0: i32) -> (i32, i32) {
    %c0_i32 = arith.constant 0 : i32
    %c0_i32_0 = arith.constant 0 : i32
    return %arg0, %c0_i32 : i32, i32
  }
  func.func @transform_1(%arg0: i32) -> (i32, i32) {
    %c0_i32 = arith.constant 0 : i32
    %c0_i32_0 = arith.constant 0 : i32
    return %arg0, %c0_i32 : i32, i32
  }
  func.func @transform_2(%arg0: i32) -> (i32, i32) {
    %c0_i32 = arith.constant 0 : i32
    %c0_i32_0 = arith.constant 0 : i32
    %c0_i32_1 = arith.constant 0 : i32
    return %c0_i32, %c0_i32_0 : i32, i32
  }
  func.func @transform_3(%arg0: i32) -> (i32, i32) {
    %c0_i32 = arith.constant 0 : i32
    %c0_i32_0 = arith.constant 0 : i32
    %c0_i32_1 = arith.constant 0 : i32
    return %c0_i32, %c0_i32_0 : i32, i32
  }
  func.func @transform_4(%arg0: i32) -> (i32, i32) {
    %c0_i32 = arith.constant 0 : i32
    %c0_i32_0 = arith.constant 0 : i32
    %c0_i32_1 = arith.constant 0 : i32
    return %c0_i32, %c0_i32_0 : i32, i32
  }
  func.func @transform_5(%arg0: i32) -> (i32, i32) {
    %c0_i32 = arith.constant 0 : i32
    %c0_i32_0 = arith.constant 0 : i32
    %c0_i32_1 = arith.constant 0 : i32
    return %c0_i32, %c0_i32_0 : i32, i32
  }
  func.func @transform_6(%arg0: i32) -> (i32, i32) {
    %c0_i32 = arith.constant 0 : i32
    %c0_i32_0 = arith.constant 0 : i32
    %c0_i32_1 = arith.constant 0 : i32
    return %c0_i32, %c0_i32_0 : i32, i32
  }
  func.func @transform_7(%arg0: i32) -> (i32, i32) {
    %c0_i32 = arith.constant 0 : i32
    %c0_i32_0 = arith.constant 0 : i32
    %c0_i32_1 = arith.constant 0 : i32
    return %c0_i32, %c0_i32_0 : i32, i32
  }
  func.func @transform_8(%arg0: i32) -> (i32, i32) {
    %c0_i32 = arith.constant 0 : i32
    %c0_i32_0 = arith.constant 0 : i32
    %c0_i32_1 = arith.constant 0 : i32
    return %c0_i32, %c0_i32_0 : i32, i32
  }
  func.func @transform_9(%arg0: i32) -> (i32, i32) {
    %c0_i32 = arith.constant 0 : i32
    %c0_i32_0 = arith.constant 0 : i32
    return %arg0, %c0_i32 : i32, i32
  }
}

</mosaic_0001>

<llo_original>
// kernel: color_model_mlp_forward.1
$region0: #{color_model_mlp_forward.1}
  #allocation0 [shape = 'u32[]', space=smem, size = 0x4, offset = 0x4, fixed_abs, tag = 'smem constant byte address 0x4 - core index']
  #allocation1 [shape = 'u32[144,128]{1,0:T(1,128)}', space=vmem, size = 0x12000, scoped, tag = 'internal scratch']
  %s0 = inlined_call_operand.vmem [shape: f32[2,128], index: 0, kind: input, shape index: {}]
  %s1 = inlined_call_operand.vmem [shape: f32[2,128], index: 1, kind: input, shape index: {}]
  %s2 = inlined_call_operand.vmem [shape: f32[128,128], index: 2, kind: input, shape index: {}]
  %s3 = inlined_call_operand.vmem [shape: f32[128,128], index: 3, kind: input, shape index: {}]
  %s4 = inlined_call_operand.vmem [shape: f32[1,128], index: 4, kind: input, shape index: {}]
  %s5 = inlined_call_operand.vmem [shape: f32[128,128], index: 5, kind: input, shape index: {}]
  %s6 = inlined_call_operand.vmem [shape: f32[1,128], index: 6, kind: input, shape index: {}]
  %s7 = inlined_call_operand.vmem [shape: f32[128,128], index: 7, kind: input, shape index: {}]
  %s8 = inlined_call_operand.vmem [shape: f32[1,128], index: 8, kind: input, shape index: {}]
  %s9 = inlined_call_operand.vmem [shape: f32[2,128], index: 9, kind: output, shape index: {}]
  %s10 = sld [smem:[#allocation0]]
  $region46: #{color_model_mlp_forward.1} parent=0
    _
  %s12 = ssub.s32 1, %s10
  %s13 = scalar_select 0, %s12, %s10
  // Predicated region
  $region2: #{color_model_mlp_forward.1} parent=0 // pred_check
    _
  $region3: #{color_model_mlp_forward.1} parent=0 // pred_check_branch
    %15 = sbr.rel (0) target = $region5
  $region4: #{color_model_mlp_forward.1} parent=0 // pred_region
    _
  $region5: #{color_model_mlp_forward.1} parent=0 // pred_fallthru
    _
  // Predicated region
  $region6: #{color_model_mlp_forward.1} parent=0 // pred_check
    _
  $region7: #{color_model_mlp_forward.1} parent=0 // pred_check_branch
    %17 = sbr.rel (0) target = $region9
  $region8: #{color_model_mlp_forward.1} parent=0 // pred_region
    _
  $region9: #{color_model_mlp_forward.1} parent=0 // pred_fallthru
    _
  // Predicated region
  $region10: #{color_model_mlp_forward.1} parent=0 // pred_check
    _
  $region11: #{color_model_mlp_forward.1} parent=0 // pred_check_branch
    %19 = sbr.rel (0) target = $region13
  $region12: #{color_model_mlp_forward.1} parent=0 // pred_region
    _
  $region13: #{color_model_mlp_forward.1} parent=0 // pred_fallthru
    _
  // Predicated region
  $region14: #{color_model_mlp_forward.1} parent=0 // pred_check
    _
  $region15: #{color_model_mlp_forward.1} parent=0 // pred_check_branch
    %21 = sbr.rel (0) target = $region17
  $region16: #{color_model_mlp_forward.1} parent=0 // pred_region
    _
  $region17: #{color_model_mlp_forward.1} parent=0 // pred_fallthru
    _
  // Predicated region
  $region18: #{color_model_mlp_forward.1} parent=0 // pred_check
    _
  $region19: #{color_model_mlp_forward.1} parent=0 // pred_check_branch
    %23 = sbr.rel (0) target = $region21
  $region20: #{color_model_mlp_forward.1} parent=0 // pred_region
    _
  $region21: #{color_model_mlp_forward.1} parent=0 // pred_fallthru
    _
  // Predicated region
  $region22: #{color_model_mlp_forward.1} parent=0 // pred_check
    _
  $region23: #{color_model_mlp_forward.1} parent=0 // pred_check_branch
    %25 = sbr.rel (0) target = $region25
  $region24: #{color_model_mlp_forward.1} parent=0 // pred_region
    _
  $region25: #{color_model_mlp_forward.1} parent=0 // pred_fallthru
    _
  // Predicated region
  $region26: #{color_model_mlp_forward.1} parent=0 // pred_check
    _
  $region27: #{color_model_mlp_forward.1} parent=0 // pred_check_branch
    %27 = sbr.rel (0) target = $region29
  $region28: #{color_model_mlp_forward.1} parent=0 // pred_region
    _
  $region29: #{color_model_mlp_forward.1} parent=0 // pred_fallthru
    _
  // Predicated region
  $region30: #{color_model_mlp_forward.1} parent=0 // pred_check
    _
  $region31: #{color_model_mlp_forward.1} parent=0 // pred_check_branch
    %29 = sbr.rel (0) target = $region33
  $region32: #{color_model_mlp_forward.1} parent=0 // pred_region
    _
  $region33: #{color_model_mlp_forward.1} parent=0 // pred_fallthru
    _
  // Predicated region
  $region34: #{color_model_mlp_forward.1} parent=0 // pred_check
    _
  $region35: #{color_model_mlp_forward.1} parent=0 // pred_check_branch
    %31 = sbr.rel (0) target = $region37
  $region36: #{color_model_mlp_forward.1} parent=0 // pred_region
    _
  $region37: #{color_model_mlp_forward.1} parent=0 // pred_fallthru
    _
  %v32 = vld [vmem:[%s0] sm:$0x3]
  %v33 = vld [vmem:[%s1] sm:$0x3]
  %v34 = vld [vmem:[%s2] sm:$0xff]
  %v35 = vld [vmem:[%s2 + $0x8] sm:$0xff]
  %v36 = vld [vmem:[%s2 + $0x10] sm:$0xff]
  %v37 = vld [vmem:[%s2 + $0x18] sm:$0xff]
  %v38 = vld [vmem:[%s2 + $0x20] sm:$0xff]
  %v39 = vld [vmem:[%s2 + $0x28] sm:$0xff]
  %v40 = vld [vmem:[%s2 + $0x30] sm:$0xff]
  %v41 = vld [vmem:[%s2 + $0x38] sm:$0xff]
  %v42 = vld [vmem:[%s2 + $0x40] sm:$0xff]
  %v43 = vld [vmem:[%s2 + $0x48] sm:$0xff]
  %v44 = vld [vmem:[%s2 + $0x50] sm:$0xff]
  %v45 = vld [vmem:[%s2 + $0x58] sm:$0xff]
  %v46 = vld [vmem:[%s2 + $0x60] sm:$0xff]
  %v47 = vld [vmem:[%s2 + $0x68] sm:$0xff]
  %v48 = vld [vmem:[%s2 + $0x70] sm:$0xff]
  %v49 = vld [vmem:[%s2 + $0x78] sm:$0xff]
  %v50 = vld [vmem:[%s3] sm:$0xff]
  %v51 = vld [vmem:[%s3 + $0x8] sm:$0xff]
  %v52 = vld [vmem:[%s3 + $0x10] sm:$0xff]
  %v53 = vld [vmem:[%s3 + $0x18] sm:$0xff]
  %v54 = vld [vmem:[%s3 + $0x20] sm:$0xff]
  %v55 = vld [vmem:[%s3 + $0x28] sm:$0xff]
  %v56 = vld [vmem:[%s3 + $0x30] sm:$0xff]
  %v57 = vld [vmem:[%s3 + $0x38] sm:$0xff]
  %v58 = vld [vmem:[%s3 + $0x40] sm:$0xff]
  %v59 = vld [vmem:[%s3 + $0x48] sm:$0xff]
  %v60 = vld [vmem:[%s3 + $0x50] sm:$0xff]
  %v61 = vld [vmem:[%s3 + $0x58] sm:$0xff]
  %v62 = vld [vmem:[%s3 + $0x60] sm:$0xff]
  %v63 = vld [vmem:[%s3 + $0x68] sm:$0xff]
  %v64 = vld [vmem:[%s3 + $0x70] sm:$0xff]
  %v65 = vld [vmem:[%s3 + $0x78] sm:$0xff]
  %66 = vmatprep.subr.mxu0 0.0
  %67 = vmatpush1.msra.mxu0 %v65
  %68 = vmatprep.subr.mxu0 0.0
  %69 = vmatpush1.msra.mxu0 %v64
  %70 = vmatprep.subr.mxu0 0.0
  %71 = vmatpush1.msra.mxu0 %v63
  %72 = vmatprep.subr.mxu0 0.0
  %73 = vmatpush1.msra.mxu0 %v62
  %74 = vmatprep.subr.mxu0 0.0
  %75 = vmatpush1.msra.mxu0 %v61
  %76 = vmatprep.subr.mxu0 0.0
  %77 = vmatpush1.msra.mxu0 %v60
  %78 = vmatprep.subr.mxu0 0.0
  %79 = vmatpush1.msra.mxu0 %v59
  %80 = vmatprep.subr.mxu0 0.0
  %81 = vmatpush1.msra.mxu0 %v58
  %82 = vmatprep.subr.mxu0 0.0
  %83 = vmatpush1.msra.mxu0 %v57
  %84 = vmatprep.subr.mxu0 0.0
  %85 = vmatpush1.msra.mxu0 %v56
  %86 = vmatprep.subr.mxu0 0.0
  %87 = vmatpush1.msra.mxu0 %v55
  %88 = vmatprep.subr.mxu0 0.0
  %89 = vmatpush1.msra.mxu0 %v54
  %90 = vmatprep.subr.mxu0 0.0
  %91 = vmatpush1.msra.mxu0 %v53
  %92 = vmatprep.subr.mxu0 0.0
  %93 = vmatpush1.msra.mxu0 %v52
  %94 = vmatprep.subr.mxu0 0.0
  %95 = vmatpush1.msra.mxu0 %v51
  %96 = vmatprep.subr.mxu0 0.0
  %97 = vmatpush1.msra.mxu0 %v50
  %98 = vmatprep.subr.mxu0 0.0
  %99 = vmatpush2.msra.mxu0 0.0
  %100 = vmatprep.subr.mxu0 0.0
  %101 = vmatpush2.msra.mxu0 0.0
  %102 = vmatprep.subr.mxu0 0.0
  %103 = vmatpush2.msra.mxu0 0.0
  %104 = vmatprep.subr.mxu0 0.0
  %105 = vmatpush2.msra.mxu0 0.0
  %106 = vmatprep.subr.mxu0 0.0
  %107 = vmatpush2.msra.mxu0 0.0
  %108 = vmatprep.subr.mxu0 0.0
  %109 = vmatpush2.msra.mxu0 0.0
  %110 = vmatprep.subr.mxu0 0.0
  %111 = vmatpush2.msra.mxu0 0.0
  %112 = vmatprep.subr.mxu0 0.0
  %113 = vmatpush2.msra.mxu0 0.0
  %114 = vmatprep.subr.mxu0 0.0
  %115 = vmatpush2.msra.mxu0 0.0
  %116 = vmatprep.subr.mxu0 0.0
  %117 = vmatpush2.msra.mxu0 0.0
  %118 = vmatprep.subr.mxu0 0.0
  %119 = vmatpush2.msra.mxu0 0.0
  %120 = vmatprep.subr.mxu0 0.0
  %121 = vmatpush2.msra.mxu0 0.0
  %122 = vmatprep.subr.mxu0 0.0
  %123 = vmatpush2.msra.mxu0 0.0
  %124 = vmatprep.subr.mxu0 0.0
  %125 = vmatpush2.msra.mxu0 0.0
  %126 = vmatprep.subr.mxu0 0.0
  %127 = vmatpush2.msra.mxu0 0.0
  %128 = vmatprep.subr.mxu0 0.0
  %129 = vmatpush2.msra.mxu0 0.0
  %130 = vmatprep.mubr.f32.mxu0 0.0
  %131 = vmatmul.mubr.f32.gmra.mxu0 %v33
  %v132 = vpop.f32.mrf.mxu0
  %v133 = vadd.f32 0.0, %v132
  %v134 = vpop.f32.mrf.mxu0
  %135 = vdwg.mxu0
  %136 = vmatprep.subr.mxu0 0.0
  %137 = vmatpush1.msra.mxu0 %v49
  %138 = vmatprep.subr.mxu0 0.0
  %139 = vmatpush1.msra.mxu0 %v48
  %140 = vmatprep.subr.mxu0 0.0
  %141 = vmatpush1.msra.mxu0 %v47
  %142 = vmatprep.subr.mxu0 0.0
  %143 = vmatpush1.msra.mxu0 %v46
  %144 = vmatprep.subr.mxu0 0.0
  %145 = vmatpush1.msra.mxu0 %v45
  %146 = vmatprep.subr.mxu0 0.0
  %147 = vmatpush1.msra.mxu0 %v44
  %148 = vmatprep.subr.mxu0 0.0
  %149 = vmatpush1.msra.mxu0 %v43
  %150 = vmatprep.subr.mxu0 0.0
  %151 = vmatpush1.msra.mxu0 %v42
  %152 = vmatprep.subr.mxu0 0.0
  %153 = vmatpush1.msra.mxu0 %v41
  %154 = vmatprep.subr.mxu0 0.0
  %155 = vmatpush1.msra.mxu0 %v40
  %156 = vmatprep.subr.mxu0 0.0
  %157 = vmatpush1.msra.mxu0 %v39
  %158 = vmatprep.subr.mxu0 0.0
  %159 = vmatpush1.msra.mxu0 %v38
  %160 = vmatprep.subr.mxu0 0.0
  %161 = vmatpush1.msra.mxu0 %v37
  %162 = vmatprep.subr.mxu0 0.0
  %163 = vmatpush1.msra.mxu0 %v36
  %164 = vmatprep.subr.mxu0 0.0
  %165 = vmatpush1.msra.mxu0 %v35
  %166 = vmatprep.subr.mxu0 0.0
  %167 = vmatpush1.msra.mxu0 %v34
  %168 = vmatprep.subr.mxu0 0.0
  %169 = vmatpush2.msra.mxu0 0.0
  %170 = vmatprep.subr.mxu0 0.0
  %171 = vmatpush2.msra.mxu0 0.0
  %172 = vmatprep.subr.mxu0 0.0
  %173 = vmatpush2.msra.mxu0 0.0
  %174 = vmatprep.subr.mxu0 0.0
  %175 = vmatpush2.msra.mxu0 0.0
  %176 = vmatprep.subr.mxu0 0.0
  %177 = vmatpush2.msra.mxu0 0.0
  %178 = vmatprep.subr.mxu0 0.0
  %179 = vmatpush2.msra.mxu0 0.0
  %180 = vmatprep.subr.mxu0 0.0
  %181 = vmatpush2.msra.mxu0 0.0
  %182 = vmatprep.subr.mxu0 0.0
  %183 = vmatpush2.msra.mxu0 0.0
  %184 = vmatprep.subr.mxu0 0.0
  %185 = vmatpush2.msra.mxu0 0.0
  %186 = vmatprep.subr.mxu0 0.0
  %187 = vmatpush2.msra.mxu0 0.0
  %188 = vmatprep.subr.mxu0 0.0
  %189 = vmatpush2.msra.mxu0 0.0
  %190 = vmatprep.subr.mxu0 0.0
  %191 = vmatpush2.msra.mxu0 0.0
  %192 = vmatprep.subr.mxu0 0.0
  %193 = vmatpush2.msra.mxu0 0.0
  %194 = vmatprep.subr.mxu0 0.0
  %195 = vmatpush2.msra.mxu0 0.0
  %196 = vmatprep.subr.mxu0 0.0
  %197 = vmatpush2.msra.mxu0 0.0
  %198 = vmatprep.subr.mxu0 0.0
  %199 = vmatpush2.msra.mxu0 0.0
  %200 = vmatprep.mubr.f32.mxu0 0.0
  %201 = vmatmul.mubr.f32.gmra.mxu0 %v32
  %v202 = vpop.f32.mrf.mxu0
  %v203 = vadd.f32 %v133, %v202
  %v204 = vpop.f32.mrf.mxu0
  %205 = vdwg.mxu0
  %v206 = vld [vmem:[%s4] sm:$0x1]
  %v208 = vlaneseq
  %v209 = vshrl.u32 %v208, 7
  %v210 = vsub.s32 0, %v209
  %v211 = vrot.slane %v206, %v210
  %v213 = vadd.f32 %v203, %v211
  %v214 = vmax.f32 %v213, 0.0
  %v215 = vld [vmem:[%s5] sm:$0xff]
  %v216 = vld [vmem:[%s5 + $0x8] sm:$0xff]
  %v217 = vld [vmem:[%s5 + $0x10] sm:$0xff]
  %v218 = vld [vmem:[%s5 + $0x18] sm:$0xff]
  %v219 = vld [vmem:[%s5 + $0x20] sm:$0xff]
  %v220 = vld [vmem:[%s5 + $0x28] sm:$0xff]
  %v221 = vld [vmem:[%s5 + $0x30] sm:$0xff]
  %v222 = vld [vmem:[%s5 + $0x38] sm:$0xff]
  %v223 = vld [vmem:[%s5 + $0x40] sm:$0xff]
  %v224 = vld [vmem:[%s5 + $0x48] sm:$0xff]
  %v225 = vld [vmem:[%s5 + $0x50] sm:$0xff]
  %v226 = vld [vmem:[%s5 + $0x58] sm:$0xff]
  %v227 = vld [vmem:[%s5 + $0x60] sm:$0xff]
  %v228 = vld [vmem:[%s5 + $0x68] sm:$0xff]
  %v229 = vld [vmem:[%s5 + $0x70] sm:$0xff]
  %v230 = vld [vmem:[%s5 + $0x78] sm:$0xff]
  %v231 = vld [vmem:[%s6] sm:$0x1]
  %v233 = vlaneseq
  %v234 = vshrl.u32 %v233, 7
  %v235 = vsub.s32 0, %v234
  %v236 = vrot.slane %v231, %v235
  %238 = vmatprep.subr.mxu0 0.0
  %239 = vmatpush1.msra.mxu0 %v230
  %240 = vmatprep.subr.mxu0 0.0
  %241 = vmatpush1.msra.mxu0 %v229
  %242 = vmatprep.subr.mxu0 0.0
  %243 = vmatpush1.msra.mxu0 %v228
  %244 = vmatprep.subr.mxu0 0.0
  %245 = vmatpush1.msra.mxu0 %v227
  %246 = vmatprep.subr.mxu0 0.0
  %247 = vmatpush1.msra.mxu0 %v226
  %248 = vmatprep.subr.mxu0 0.0
  %249 = vmatpush1.msra.mxu0 %v225
  %250 = vmatprep.subr.mxu0 0.0
  %251 = vmatpush1.msra.mxu0 %v224
  %252 = vmatprep.subr.mxu0 0.0
  %253 = vmatpush1.msra.mxu0 %v223
  %254 = vmatprep.subr.mxu0 0.0
  %255 = vmatpush1.msra.mxu0 %v222
  %256 = vmatprep.subr.mxu0 0.0
  %257 = vmatpush1.msra.mxu0 %v221
  %258 = vmatprep.subr.mxu0 0.0
  %259 = vmatpush1.msra.mxu0 %v220
  %260 = vmatprep.subr.mxu0 0.0
  %261 = vmatpush1.msra.mxu0 %v219
  %262 = vmatprep.subr.mxu0 0.0
  %263 = vmatpush1.msra.mxu0 %v218
  %264 = vmatprep.subr.mxu0 0.0
  %265 = vmatpush1.msra.mxu0 %v217
  %266 = vmatprep.subr.mxu0 0.0
  %267 = vmatpush1.msra.mxu0 %v216
  %268 = vmatprep.subr.mxu0 0.0
  %269 = vmatpush1.msra.mxu0 %v215
  %270 = vmatprep.subr.mxu0 0.0
  %271 = vmatpush2.msra.mxu0 0.0
  %272 = vmatprep.subr.mxu0 0.0
  %273 = vmatpush2.msra.mxu0 0.0
  %274 = vmatprep.subr.mxu0 0.0
  %275 = vmatpush2.msra.mxu0 0.0
  %276 = vmatprep.subr.mxu0 0.0
  %277 = vmatpush2.msra.mxu0 0.0
  %278 = vmatprep.subr.mxu0 0.0
  %279 = vmatpush2.msra.mxu0 0.0
  %280 = vmatprep.subr.mxu0 0.0
  %281 = vmatpush2.msra.mxu0 0.0
  %282 = vmatprep.subr.mxu0 0.0
  %283 = vmatpush2.msra.mxu0 0.0
  %284 = vmatprep.subr.mxu0 0.0
  %285 = vmatpush2.msra.mxu0 0.0
  %286 = vmatprep.subr.mxu0 0.0
  %287 = vmatpush2.msra.mxu0 0.0
  %288 = vmatprep.subr.mxu0 0.0
  %289 = vmatpush2.msra.mxu0 0.0
  %290 = vmatprep.subr.mxu0 0.0
  %291 = vmatpush2.msra.mxu0 0.0
  %292 = vmatprep.subr.mxu0 0.0
  %293 = vmatpush2.msra.mxu0 0.0
  %294 = vmatprep.subr.mxu0 0.0
  %295 = vmatpush2.msra.mxu0 0.0
  %296 = vmatprep.subr.mxu0 0.0
  %297 = vmatpush2.msra.mxu0 0.0
  %298 = vmatprep.subr.mxu0 0.0
  %299 = vmatpush2.msra.mxu0 0.0
  %300 = vmatprep.subr.mxu0 0.0
  %301 = vmatpush2.msra.mxu0 0.0
  %302 = vmatprep.mubr.f32.mxu0 0.0
  %303 = vmatmul.mubr.f32.gmra.mxu0 %v214
  %v304 = vpop.f32.mrf.mxu0
  %v305 = vadd.f32 %v236, %v304
  %v306 = vpop.f32.mrf.mxu0
  %307 = vdwg.mxu0
  %v308 = vmax.f32 %v305, 0.0
  %v309 = vld [vmem:[%s7] sm:$0xff]
  %v310 = vld [vmem:[%s7 + $0x8] sm:$0xff]
  %v311 = vld [vmem:[%s7 + $0x10] sm:$0xff]
  %v312 = vld [vmem:[%s7 + $0x18] sm:$0xff]
  %v313 = vld [vmem:[%s7 + $0x20] sm:$0xff]
  %v314 = vld [vmem:[%s7 + $0x28] sm:$0xff]
  %v315 = vld [vmem:[%s7 + $0x30] sm:$0xff]
  %v316 = vld [vmem:[%s7 + $0x38] sm:$0xff]
  %v317 = vld [vmem:[%s7 + $0x40] sm:$0xff]
  %v318 = vld [vmem:[%s7 + $0x48] sm:$0xff]
  %v319 = vld [vmem:[%s7 + $0x50] sm:$0xff]
  %v320 = vld [vmem:[%s7 + $0x58] sm:$0xff]
  %v321 = vld [vmem:[%s7 + $0x60] sm:$0xff]
  %v322 = vld [vmem:[%s7 + $0x68] sm:$0xff]
  %v323 = vld [vmem:[%s7 + $0x70] sm:$0xff]
  %v324 = vld [vmem:[%s7 + $0x78] sm:$0xff]
  %v325 = vld [vmem:[%s8] sm:$0x1]
  %v327 = vlaneseq
  %v328 = vshrl.u32 %v327, 7
  %v329 = vsub.s32 0, %v328
  %v330 = vrot.slane %v325, %v329
  %332 = vmatprep.subr.mxu0 0.0
  %333 = vmatpush1.msra.mxu0 %v324
  %334 = vmatprep.subr.mxu0 0.0
  %335 = vmatpush1.msra.mxu0 %v323
  %336 = vmatprep.subr.mxu0 0.0
  %337 = vmatpush1.msra.mxu0 %v322
  %338 = vmatprep.subr.mxu0 0.0
  %339 = vmatpush1.msra.mxu0 %v321
  %340 = vmatprep.subr.mxu0 0.0
  %341 = vmatpush1.msra.mxu0 %v320
  %342 = vmatprep.subr.mxu0 0.0
  %343 = vmatpush1.msra.mxu0 %v319
  %344 = vmatprep.subr.mxu0 0.0
  %345 = vmatpush1.msra.mxu0 %v318
  %346 = vmatprep.subr.mxu0 0.0
  %347 = vmatpush1.msra.mxu0 %v317
  %348 = vmatprep.subr.mxu0 0.0
  %349 = vmatpush1.msra.mxu0 %v316
  %350 = vmatprep.subr.mxu0 0.0
  %351 = vmatpush1.msra.mxu0 %v315
  %352 = vmatprep.subr.mxu0 0.0
  %353 = vmatpush1.msra.mxu0 %v314
  %354 = vmatprep.subr.mxu0 0.0
  %355 = vmatpush1.msra.mxu0 %v313
  %356 = vmatprep.subr.mxu0 0.0
  %357 = vmatpush1.msra.mxu0 %v312
  %358 = vmatprep.subr.mxu0 0.0
  %359 = vmatpush1.msra.mxu0 %v311
  %360 = vmatprep.subr.mxu0 0.0
  %361 = vmatpush1.msra.mxu0 %v310
  %362 = vmatprep.subr.mxu0 0.0
  %363 = vmatpush1.msra.mxu0 %v309
  %364 = vmatprep.subr.mxu0 0.0
  %365 = vmatpush2.msra.mxu0 0.0
  %366 = vmatprep.subr.mxu0 0.0
  %367 = vmatpush2.msra.mxu0 0.0
  %368 = vmatprep.subr.mxu0 0.0
  %369 = vmatpush2.msra.mxu0 0.0
  %370 = vmatprep.subr.mxu0 0.0
  %371 = vmatpush2.msra.mxu0 0.0
  %372 = vmatprep.subr.mxu0 0.0
  %373 = vmatpush2.msra.mxu0 0.0
  %374 = vmatprep.subr.mxu0 0.0
  %375 = vmatpush2.msra.mxu0 0.0
  %376 = vmatprep.subr.mxu0 0.0
  %377 = vmatpush2.msra.mxu0 0.0
  %378 = vmatprep.subr.mxu0 0.0
  %379 = vmatpush2.msra.mxu0 0.0
  %380 = vmatprep.subr.mxu0 0.0
  %381 = vmatpush2.msra.mxu0 0.0
  %382 = vmatprep.subr.mxu0 0.0
  %383 = vmatpush2.msra.mxu0 0.0
  %384 = vmatprep.subr.mxu0 0.0
  %385 = vmatpush2.msra.mxu0 0.0
  %386 = vmatprep.subr.mxu0 0.0
  %387 = vmatpush2.msra.mxu0 0.0
  %388 = vmatprep.subr.mxu0 0.0
  %389 = vmatpush2.msra.mxu0 0.0
  %390 = vmatprep.subr.mxu0 0.0
  %391 = vmatpush2.msra.mxu0 0.0
  %392 = vmatprep.subr.mxu0 0.0
  %393 = vmatpush2.msra.mxu0 0.0
  %394 = vmatprep.subr.mxu0 0.0
  %395 = vmatpush2.msra.mxu0 0.0
  %396 = vmatprep.mubr.f32.mxu0 0.0
  %397 = vmatmul.mubr.f32.gmra.mxu0 %v308
  %v398 = vpop.f32.mrf.mxu0
  %v399 = vadd.f32 %v330, %v398
  %v400 = vpop.f32.mrf.mxu0
  %401 = vdwg.mxu0
  %402 = vst [vmem:[%s9] sm:$0x3] %v399
  // Predicated region
  $region38: #{color_model_mlp_forward.1} parent=0 // pred_check
    _
  $region39: #{color_model_mlp_forward.1} parent=0 // pred_check_branch
    %404 = sbr.rel (0) target = $region41
  $region40: #{color_model_mlp_forward.1} parent=0 // pred_region
    _
  $region41: #{color_model_mlp_forward.1} parent=0 // pred_fallthru
    _
  // Predicated region
  $region42: #{color_model_mlp_forward.1} parent=0 // pred_check
    _
  $region43: #{color_model_mlp_forward.1} parent=0 // pred_check_branch
    %406 = sbr.rel (0) target = $region45
  $region44: #{color_model_mlp_forward.1} parent=0 // pred_region
    _
  $region45: #{color_model_mlp_forward.1} parent=0 // pred_fallthru
    _

</llo_original>
